<compile_context>
chip_gen: v6e
topology: v6e:2x2x1
jax: 0.10.0
libtpu: 0.0.40
codegen_flags: <defaults>
</compile_context>

<pallas_src>
import functools
import math

import jax
import jax.numpy as jnp
from jax.experimental import pallas as pl
from jax.experimental.pallas import tpu as pltpu


def label_smoothing_kernel(x_ref, tgt_ref, o_ref, acc_ref, cnt_ref, *,
                           neg_eps, neg_conf, row_const, pad_idx, n_rows,
                           tiles_per_core):
    # x_ref:   (tm, vocab)   log-probs in their native dtype (f32 or bf16)
    # tgt_ref: (tm, 1)       int32 targets
    # o_ref:   (1, 8, 128)   per-core partial loss slab (written on last step only)
    # acc_ref: (8, vocab)    f32 resident partial-sum accumulator
    # cnt_ref: (1, 1)        f32 resident count of valid rows
    i = pl.program_id(1)

    @pl.when(i == 0)
    def _():
        acc_ref[...] = jnp.zeros_like(acc_ref)
        cnt_ref[...] = jnp.zeros_like(cnt_ref)

    x = x_ref[...].astype(jnp.float32)          # upcast in-kernel (bf16 ingest stays cheap)
    tgt = tgt_ref[...]                          # (tm, 1) int32
    tm, vocab = x.shape

    # Global row ids of this tile (unclamped, so duplicated/ragged tiles mask to zero).
    tile_idx = pl.program_id(0) * tiles_per_core + i
    row_ids = tile_idx * tm + jax.lax.broadcasted_iota(jnp.int32, (tm, 1), 0)
    valid = jnp.logical_and(tgt != pad_idx, row_ids < n_rows)    # (tm, 1) bool

    # Zero invalid rows with a select (never multiply garbage/NaN by zero).
    xm = jnp.where(valid, x, 0.0)

    # w = -smooth_target:  -(1-smoothing) at the target column, 0 at the pad column,
    # -eps elsewhere.  Two compares + two selects, no log, no scatter.
    col = jax.lax.broadcasted_iota(jnp.int32, (tm, vocab), 1)
    w = jnp.where(col == tgt, neg_conf,
                  jnp.where(col == pad_idx, 0.0, neg_eps))
    contrib = w * xm                             # (tm, vocab) f32

    # Layout-preserving partial accumulation: sublane-aligned slices + vreg adds only;
    # no per-step cross-lane reduce.
    acc = acc_ref[...]
    for k in range(tm // 8):
        acc = acc + contrib[k * 8:(k + 1) * 8, :]
    acc_ref[...] = acc

    # Count valid rows (carries the constant sum_v st*log(st) term).
    cnt_ref[...] = cnt_ref[...] + jnp.sum(valid.astype(jnp.float32))

    @pl.when(i == pl.num_programs(1) - 1)
    def _():
        total = jnp.sum(acc_ref[...]) + cnt_ref[...] * row_const     # (1, 1)
        o_ref[...] = jnp.broadcast_to(total, o_ref.shape).astype(o_ref.dtype)


def label_smoothing_loss(x, target, *, smoothing, pad_idx,
                         tm_max=1024, tile_f32_bytes=4 * 1024 * 1024):
    """x: (batch, len, vocab) log-probs (f32 or bf16); target: (batch, len) int.
    Returns the scalar f32 KLDiv(reduction='sum') loss against the smoothed one-hot."""
    batch, seq_len, vocab = x.shape
    assert vocab > 2, "LabelSmoothing requires vocab_size > 2 (smoothing/(V-2))"
    n = batch * seq_len

    x2 = x.reshape(n, vocab)                    # free reshape; keep the input dtype
    tgt = target.reshape(n, 1).astype(jnp.int32)

    itemsize = jnp.dtype(x2.dtype).itemsize
    v_lanes = pl.cdiv(vocab, 128) * 128         # lane-padded width (VMEM sizing only)

    # Row tile: multiple of 8, sized so the f32 working tile stays within tile_f32_bytes.
    tm = (tile_f32_bytes // (v_lanes * 4)) // 8 * 8
    tm = max(8, min(tm_max, tm))
    tm = min(tm, pl.cdiv(n, 8) * 8)

    n_tiles = pl.cdiv(n, tm)
    num_par = 2 if n_tiles >= 2 else 1          # megacore split (sequential on 1-TC chips)
    tiles_per_core = pl.cdiv(n_tiles, num_par)

    eps = float(smoothing) / (vocab - 2)
    conf = 1.0 - float(smoothing)
    row_const = ((vocab - 2) * (eps * math.log(eps) if eps > 0.0 else 0.0)
                 + (conf * math.log(conf) if conf > 0.0 else 0.0))

    kernel = functools.partial(
        label_smoothing_kernel,
        neg_eps=-eps, neg_conf=-conf, row_const=row_const,
        pad_idx=int(pad_idx), n_rows=n, tiles_per_core=tiles_per_core)

    def row_block(p, i):
        # Clamp so a fully-empty trailing tile re-reads the last real tile (its rows are
        # masked in-kernel via the unclamped global row index).
        return (jnp.minimum(p * tiles_per_core + i, n_tiles - 1), 0)

    # Explicit VMEM budget: double-buffered x/tgt/out blocks + resident scratch + headroom
    # for fused elementwise temporaries. Overrides v5e's 16 MiB scoped default, stays well
    # inside v7x's 64 MiB physical VMEM.
    vmem_limit = (2 * tm * v_lanes * itemsize        # x blocks (double buffered)
                  + 2 * tm * 128 * 4                 # tgt blocks (lane padded)
                  + 2 * 8 * 128 * 4                  # output blocks
                  + 8 * v_lanes * 4 + 8 * 128 * 4    # scratch accumulators
                  + 3 * tm * v_lanes * 4             # elementwise temporaries headroom
                  + (2 << 20))                       # slack

    cost = pl.CostEstimate(
        flops=int(6 * n * vocab),
        transcendentals=0,
        bytes_accessed=int(n * vocab * itemsize + n * 4 + num_par * 8 * 128 * 4))

    out = pl.pallas_call(
        kernel,
        out_shape=jax.ShapeDtypeStruct((num_par, 8, 128), jnp.float32),
        grid_spec=pltpu.PrefetchScalarGridSpec(
            num_scalar_prefetch=0,
            grid=(num_par, tiles_per_core),
            in_specs=[
                pl.BlockSpec((tm, vocab), row_block),   # full-extent vocab: no HBM padding
                pl.BlockSpec((tm, 1), row_block),
            ],
            out_specs=pl.BlockSpec((1, 8, 128), lambda p, i: (p, 0, 0)),
            scratch_shapes=[pltpu.VMEM((8, vocab), jnp.float32),
                            pltpu.VMEM((1, 1), jnp.float32)],
        ),
        compiler_params=pltpu.CompilerParams(
            dimension_semantics=("parallel", "arbitrary"),
            vmem_limit_bytes=int(vmem_limit)),
        cost_estimate=cost,
    )(x2, tgt)

    # Each core's slab carries its partial loss broadcast over (8,128); add the partials.
    return jnp.sum(out[:, 0, 0])


def reference_label_smoothing(x, target, smoothing, pad_idx):
    vocab = x.shape[-1]
    x2 = x.reshape(-1, vocab).astype(jnp.float32)
    t = target.reshape(-1)
    n = x2.shape[0]
    eps = smoothing / (vocab - 2)
    st = jnp.full((n, vocab), eps, dtype=jnp.float32)
    st = st.at[jnp.arange(n), t].set(1.0 - smoothing)
    st = st.at[:, pad_idx].set(0.0)
    st = jnp.where((t == pad_idx)[:, None], 0.0, st)
    log_st = jnp.log(jnp.where(st > 0.0, st, 1.0))
    return jnp.sum(st * (log_st - x2))


if __name__ == "__main__":
    batch, seq_len, vocab_size = 2, 9, 50
    smoothing, pad_idx = 0.1, 0

    key = jax.random.PRNGKey(0)
    kx, kt = jax.random.split(key)

    logits = jax.random.normal(kx, (batch, seq_len, vocab_size), dtype=jnp.float32)
    x = jax.nn.log_softmax(logits, axis=-1)          # module expects log-probs
    target = jax.random.randint(kt, (batch, seq_len), 0, vocab_size, dtype=jnp.int32)
    target = target.at[0, :2].set(pad_idx)           # exercise pad-row masking

    # tm_max=8 forces multiple row tiles (incl. a ragged last one) at this tiny shape,
    # exercising the 2-way parallel grid, multi-step accumulation and OOB-row masking.
    loss = label_smoothing_loss(x, target, smoothing=smoothing, pad_idx=pad_idx, tm_max=8)
    loss = jax.block_until_ready(loss)

    ref = reference_label_smoothing(x, target, smoothing, pad_idx)
    assert jnp.isfinite(loss), "non-finite loss"
    assert jnp.allclose(loss, ref, rtol=1e-5, atol=1e-4), (loss, ref)
    print("KERNEL_OK")
</pallas_src>

<mosaic_0001>
module attributes {stable_mosaic.version = 11 : i64} {
  func.func @label_smoothing_kernel(%arg0: i32, %arg1: i32, %arg2: memref<8x50xf32, #tpu.memory_space<vmem>>, %arg3: memref<8x1xi32, #tpu.memory_space<vmem>>, %arg4: memref<1x8x128xf32, #tpu.memory_space<vmem>>, %arg5: memref<8x50xf32, #tpu.memory_space<vmem>>, %arg6: memref<1x1xf32, #tpu.memory_space<vmem>>) attributes {dimension_semantics = [#tpu.dimension_semantics<parallel>, #tpu.dimension_semantics<arbitrary>], iteration_bounds = array<i64: 2, 2>, scalar_prefetch = 0 : i64, scratch_operands = 2 : i64, tpu.core_type = #tpu.core_type<tc>, window_params = [{transform_indices = @transform_0, window_bounds = array<i64: 8, 50>}, {transform_indices = @transform_1, window_bounds = array<i64: 8, 1>}, {transform_indices = @transform_2, window_bounds = array<i64: 1, 8, 128>}]} {
    %c0_i32 = arith.constant 0 : i32
    %0 = arith.cmpi eq, %arg1, %c0_i32 : i32
    %1 = arith.extui %0 : i1 to i32
    %c0_i32_0 = arith.constant 0 : i32
    %2 = arith.cmpi ne, %1, %c0_i32_0 : i32
    scf.if %2 {
      %cst_19 = arith.constant 0.000000e+00 : f32
      %47 = vector.broadcast %cst_19 : f32 to vector<8x50xf32>
      %c0_20 = arith.constant 0 : index
      %c0_21 = arith.constant 0 : index
      %48 = vector.load %arg5[%c0_20, %c0_21] : memref<8x50xf32, #tpu.memory_space<vmem>>, vector<8x50xf32>
      tpu.vector_store %arg5[%c0_20, %c0_21], %47 {strides = array<i32>} : memref<8x50xf32, #tpu.memory_space<vmem>>, vector<8x50xf32>,
      %cst_22 = arith.constant 0.000000e+00 : f32
      %49 = vector.broadcast %cst_22 : f32 to vector<1x1xf32>
      %c0_23 = arith.constant 0 : index
      %c0_24 = arith.constant 0 : index
      %50 = vector.load %arg6[%c0_23, %c0_24] : memref<1x1xf32, #tpu.memory_space<vmem>>, vector<1x1xf32>
      tpu.vector_store %arg6[%c0_23, %c0_24], %49 {strides = array<i32>} : memref<1x1xf32, #tpu.memory_space<vmem>>, vector<1x1xf32>,
    } else {
    }
    %c0 = arith.constant 0 : index
    %c0_1 = arith.constant 0 : index
    %3 = vector.load %arg2[%c0, %c0_1] : memref<8x50xf32, #tpu.memory_space<vmem>>, vector<8x50xf32>
    %c0_2 = arith.constant 0 : index
    %c0_3 = arith.constant 0 : index
    %4 = vector.load %arg3[%c0_2, %c0_3] : memref<8x1xi32, #tpu.memory_space<vmem>>, vector<8x1xi32>
    %c2_i32 = arith.constant 2 : i32
    %5 = arith.muli %arg0, %c2_i32 : i32
    %6 = arith.addi %5, %arg1 : i32
    %c8_i32 = arith.constant 8 : i32
    %7 = arith.muli %6, %c8_i32 : i32
    %8 = tpu.iota {dimensions = array<i32: 0>} : vector<8x1xi32>
    %9 = vector.broadcast %7 : i32 to vector<8x1xi32>
    %10 = arith.addi %9, %8 : vector<8x1xi32>
    %c0_i32_4 = arith.constant 0 : i32
    %11 = vector.broadcast %c0_i32_4 : i32 to vector<8x1xi32>
    %12 = arith.cmpi ne, %4, %11 : vector<8x1xi32>
    %c18_i32 = arith.constant 18 : i32
    %13 = vector.broadcast %c18_i32 : i32 to vector<8x1xi32>
    %14 = arith.cmpi slt, %10, %13 : vector<8x1xi32>
    %15 = arith.andi %12, %14 : vector<8x1xi1>
    %cst = arith.constant 0.000000e+00 : f32
    %16 = vector.shape_cast %15 : vector<8x1xi1> to vector<8x1xi1>
    %17 = vector.broadcast %16 : vector<8x1xi1> to vector<8x50xi1>
    %18 = vector.broadcast %cst : f32 to vector<8x50xf32>
    %19 = arith.select %17, %3, %18 : vector<8x50xi1>, vector<8x50xf32>
    %20 = tpu.iota {dimensions = array<i32: 1>} : vector<8x50xi32>
    %21 = vector.broadcast %4 : vector<8x1xi32> to vector<8x50xi32>
    %22 = arith.cmpi eq, %20, %21 : vector<8x50xi32>
    %c0_i32_5 = arith.constant 0 : i32
    %23 = vector.broadcast %c0_i32_5 : i32 to vector<8x50xi32>
    %24 = arith.cmpi eq, %20, %23 : vector<8x50xi32>
    %cst_6 = arith.constant 0.000000e+00 : f32
    %cst_7 = arith.constant -0.00208333344 : f32
    %25 = vector.broadcast %cst_6 : f32 to vector<8x50xf32>
    %26 = vector.broadcast %cst_7 : f32 to vector<8x50xf32>
    %27 = arith.select %24, %25, %26 : vector<8x50xi1>, vector<8x50xf32>
    %cst_8 = arith.constant -0.899999976 : f32
    %28 = vector.broadcast %cst_8 : f32 to vector<8x50xf32>
    %29 = arith.select %22, %28, %27 : vector<8x50xi1>, vector<8x50xf32>
    %30 = arith.mulf %29, %19 : vector<8x50xf32>
    %c0_9 = arith.constant 0 : index
    %c0_10 = arith.constant 0 : index
    %31 = vector.load %arg5[%c0_9, %c0_10] : memref<8x50xf32, #tpu.memory_space<vmem>>, vector<8x50xf32>
    %32 = arith.addf %31, %30 : vector<8x50xf32>
    %c0_11 = arith.constant 0 : index
    %c0_12 = arith.constant 0 : index
    %33 = vector.load %arg5[%c0_11, %c0_12] : memref<8x50xf32, #tpu.memory_space<vmem>>, vector<8x50xf32>
    tpu.vector_store %arg5[%c0_11, %c0_12], %32 {strides = array<i32>} : memref<8x50xf32, #tpu.memory_space<vmem>>, vector<8x50xf32>,
    %c0_13 = arith.constant 0 : index
    %c0_14 = arith.constant 0 : index
    %34 = vector.load %arg6[%c0_13, %c0_14] : memref<1x1xf32, #tpu.memory_space<vmem>>, vector<1x1xf32>
    %35 = arith.extui %15 : vector<8x1xi1> to vector<8x1xi32>
    %36 = arith.sitofp %35 : vector<8x1xi32> to vector<8x1xf32>
    %37 = vector.shape_cast %36 : vector<8x1xf32> to vector<1x8x1xf32>
    %cst_15 = arith.constant dense<0.000000e+00> : vector<1xf32>
    %38 = vector.multi_reduction <add>, %37, %cst_15 [1, 2] : vector<1x8x1xf32> to vector<1xf32>
    %39 = vector.shape_cast %38 : vector<1xf32> to vector<1x1x1xf32>
    %40 = vector.extract %39[0, 0, 0] : f32 from vector<1x1x1xf32>
    %41 = vector.broadcast %40 : f32 to vector<1x1xf32>
    %42 = arith.addf %34, %41 : vector<1x1xf32>
    %c0_16 = arith.constant 0 : index
    %c0_17 = arith.constant 0 : index
    %43 = vector.load %arg6[%c0_16, %c0_17] : memref<1x1xf32, #tpu.memory_space<vmem>>, vector<1x1xf32>
    tpu.vector_store %arg6[%c0_16, %c0_17], %42 {strides = array<i32>} : memref<1x1xf32, #tpu.memory_space<vmem>>, vector<1x1xf32>,
    %c1_i32 = arith.constant 1 : i32
    %44 = arith.cmpi eq, %arg1, %c1_i32 : i32
    %45 = arith.extui %44 : i1 to i32
    %c0_i32_18 = arith.constant 0 : i32
    %46 = arith.cmpi ne, %45, %c0_i32_18 : i32
    scf.if %46 {
      %c0_19 = arith.constant 0 : index
      %c0_20 = arith.constant 0 : index
      %47 = vector.load %arg5[%c0_19, %c0_20] : memref<8x50xf32, #tpu.memory_space<vmem>>, vector<8x50xf32>
      %48 = vector.shape_cast %47 : vector<8x50xf32> to vector<1x8x50xf32>
      %cst_21 = arith.constant dense<0.000000e+00> : vector<1xf32>
      %49 = vector.multi_reduction <add>, %48, %cst_21 [1, 2] : vector<1x8x50xf32> to vector<1xf32>
      %50 = vector.shape_cast %49 : vector<1xf32> to vector<1x1x1xf32>
      %51 = vector.extract %50[0, 0, 0] : f32 from vector<1x1x1xf32>
      %c0_22 = arith.constant 0 : index
      %c0_23 = arith.constant 0 : index
      %52 = vector.load %arg6[%c0_22, %c0_23] : memref<1x1xf32, #tpu.memory_space<vmem>>, vector<1x1xf32>
      %cst_24 = arith.constant -0.712203085 : f32
      %53 = vector.broadcast %cst_24 : f32 to vector<1x1xf32>
      %54 = arith.mulf %52, %53 : vector<1x1xf32>
      %55 = vector.broadcast %51 : f32 to vector<1x1xf32>
      %56 = arith.addf %55, %54 : vector<1x1xf32>
      %57 = vector.shape_cast %56 : vector<1x1xf32> to vector<1x1x1xf32>
      %58 = vector.broadcast %57 : vector<1x1x1xf32> to vector<1x8x128xf32>
      %c0_25 = arith.constant 0 : index
      %c0_26 = arith.constant 0 : index
      %c0_27 = arith.constant 0 : index
      %59 = vector.load %arg4[%c0_25, %c0_26, %c0_27] : memref<1x8x128xf32, #tpu.memory_space<vmem>>, vector<1x8x128xf32>
      tpu.vector_store %arg4[%c0_25, %c0_26, %c0_27], %58 {strides = array<i32>} : memref<1x8x128xf32, #tpu.memory_space<vmem>>, vector<1x8x128xf32>,
    } else {
    }
    return
  }
  func.func @transform_0(%arg0: i32, %arg1: i32) -> (i32, i32) {
    %c2_i32 = arith.constant 2 : i32
    %0 = arith.muli %arg0, %c2_i32 : i32
    %1 = arith.addi %0, %arg1 : i32
    %c2_i32_0 = arith.constant 2 : i32
    %2 = arith.minsi %1, %c2_i32_0 : i32
    %c0_i32 = arith.constant 0 : i32
    %c0_i32_1 = arith.constant 0 : i32
    return %2, %c0_i32 : i32, i32
  }
  func.func @transform_1(%arg0: i32, %arg1: i32) -> (i32, i32) {
    %c2_i32 = arith.constant 2 : i32
    %0 = arith.muli %arg0, %c2_i32 : i32
    %1 = arith.addi %0, %arg1 : i32
    %c2_i32_0 = arith.constant 2 : i32
    %2 = arith.minsi %1, %c2_i32_0 : i32
    %c0_i32 = arith.constant 0 : i32
    %c0_i32_1 = arith.constant 0 : i32
    return %2, %c0_i32 : i32, i32
  }
  func.func @transform_2(%arg0: i32, %arg1: i32) -> (i32, i32, i32) {
    %c0_i32 = arith.constant 0 : i32
    %c0_i32_0 = arith.constant 0 : i32
    %c0_i32_1 = arith.constant 0 : i32
    return %arg0, %c0_i32, %c0_i32_0 : i32, i32, i32
  }
}

</mosaic_0001>

<llo_original>
// kernel: tpu_custom_call.1
$region0: #{tpu_custom_call.1}
  #allocation0 [shape = 'u32[]', space=smem, size = 0x4, offset = 0x4, fixed_abs, tag = 'smem constant byte address 0x4 - core index']
  #allocation1 [shape = 'u32[144,128]{1,0:T(1,128)}', space=vmem, size = 0x12000, scoped, tag = 'internal scratch']
  #allocation2 [shape = 'f32[8,50]{1,0:T(8,128)}', space=vmem, size = 0x1000, scoped, tag = 'scratch operand']
  #allocation3 [shape = 'f32[1,1]{1,0:T(1,128)}', space=vmem, size = 0x200, scoped, tag = 'scratch operand']
  %s0 = inlined_call_operand.vmem [shape: f32[18,50], index: 0, kind: input, shape index: {}]
  %s1 = inlined_call_operand.vmem [shape: s32[18,1], index: 1, kind: input, shape index: {}]
  %s2 = inlined_call_operand.hbm [shape: f32[2,8,128], index: 2, kind: output, shape index: {}]
  %s3 = sld [smem:[#allocation0]]
  $region49: #{tpu_custom_call.1} parent=0
    _
  %s5 = ssub.s32 1, %s3
  %s6 = scalar_select 0, %s5, %s3
  $region1: #{tpu_custom_call.1} parent=0
    #allocation4 [shape = 'u8[8192]{0}', space=vmem, size = 0x2000, scoped, tag = 'output window, operand 0']
    #allocation5 [shape = 's32[2]{0}', space=sflag, size = 0x8, scoped, tag = 'scoped memory for tpu_custom_call.1']
    %7 = vsyncpa [#allocation5], 0
    %s8 = scalar_lea.sflag [#allocation5], 1
    %9 = vsyncpa %s8, 0
    loop: start=0, step=1, limit=6
    $region2: #{tpu_custom_call.1} parent=1 // loop_pre_header
      _
    $region3: #{tpu_custom_call.1} parent=1 // loop_header
      %s11 = sphi 0, %s15
      %p12 = scmp.ge.s32.totalorder %s11, 6
      %s18 = sphi 0, %s30
      %s19 = sphi 0, %s26
      %s20 = sphi 0, %s18
      %s21 = sphi 0, %s19
      %s22 = sphi 0, %s20
      %s23 = sphi 0, %s21
      %s41 = sphi 0, %s43
      %s44 = sphi 0, %s41
      %s45 = sphi 0, %s44
      %s61 = sphi 0, %s45
      %s75 = sphi 0, %s77
      %s78 = sphi 0, %s75
      %s79 = sphi 0, %s78
      %s95 = sphi 0, %s79
      %s101 = sphi 0, %s103
      %s104 = sphi 0, %s101
      %s105 = sphi 0, %s104
      %s121 = sphi 0, %s105
    $region4: #{tpu_custom_call.1} parent=1 // loop_header_branch
      %14 = sbr.rel (%p12) target = $region8
    $region5: #{tpu_custom_call.1} parent=1 // loop_body
      %s16 = ssub.s32 %s11, 1
      %s17 = ssub.s32 %s11, 2
      %s24 = sadd.s32 1, %s19
      %p25 = scmp.ge.s32.totalorder %s24, 2
      %s26 = scalar_select %p25, 0, %s24
      %s27 = sadd.s32 1, %s18
      %s28 = scalar_select %p25, %s27, %s18
      %p29 = scmp.ge.s32.totalorder %s28, 2
      %s30 = scalar_select %p29, 0, %s28
      %s31 = smul.u32 %s18, 2
      %s32 = sadd.s32 %s31, %s19
      %p33 = scmp.lt.s32.totalorder %s32, 2
      %s34 = scalar_select %p33, %s32, 2
      %s35 = smul.u32 %s30, 2
      %s36 = sadd.s32 %s35, %s26
      %p37 = scmp.lt.s32.totalorder %s36, 2
      %s38 = scalar_select %p37, %s36, 2
      %s39 = ssub.s32 %s34, %s38
      %p40 = scmp.eq.s32.totalorder %s39, 0
      %s42 = sadd.s32 %s41, 1
      %s43 = scalar_select %p40, %s41, %s42
      %p46 = pneg %p40
      %p47 = scmp.eq.s32.totalorder %s11, 3
      %p48 = por %p46, %p47
      %p49 = scmp.ne.s32.totalorder %s41, %s44
      %p50 = scmp.eq.s32.totalorder %s11, 0
      %p51 = por %p49, %p50
      %p52 = scmp.ne.s32.totalorder %s41, %s44
      %p53 = scmp.eq.s32.totalorder %s16, 3
      %p54 = por %p52, %p53
      %p55 = scmp.ne.s32.totalorder %s44, %s45
      %p56 = scmp.eq.s32.totalorder %s16, 0
      %p57 = por %p55, %p56
      %p58 = scmp.ne.s32.totalorder %s44, %s45
      %p59 = scmp.eq.s32.totalorder %s17, 3
      %p60 = por %p58, %p59
      %p62 = scmp.ne.s32.totalorder %s45, %s61
      %p63 = scmp.eq.s32.totalorder %s17, 0
      %p64 = por %p62, %p63
      %s65 = smul.u32 %s18, 2
      %s66 = sadd.s32 %s65, %s19
      %p67 = scmp.lt.s32.totalorder %s66, 2
      %s68 = scalar_select %p67, %s66, 2
      %s69 = smul.u32 %s30, 2
      %s70 = sadd.s32 %s69, %s26
      %p71 = scmp.lt.s32.totalorder %s70, 2
      %s72 = scalar_select %p71, %s70, 2
      %s73 = ssub.s32 %s68, %s72
      %p74 = scmp.eq.s32.totalorder %s73, 0
      %s76 = sadd.s32 %s75, 1
      %s77 = scalar_select %p74, %s75, %s76
      %p80 = pneg %p74
      %p81 = scmp.eq.s32.totalorder %s11, 3
      %p82 = por %p80, %p81
      %p83 = scmp.ne.s32.totalorder %s75, %s78
      %p84 = scmp.eq.s32.totalorder %s11, 0
      %p85 = por %p83, %p84
      %p86 = scmp.ne.s32.totalorder %s75, %s78
      %p87 = scmp.eq.s32.totalorder %s16, 3
      %p88 = por %p86, %p87
      %p89 = scmp.ne.s32.totalorder %s78, %s79
      %p90 = scmp.eq.s32.totalorder %s16, 0
      %p91 = por %p89, %p90
      %p92 = scmp.ne.s32.totalorder %s78, %s79
      %p93 = scmp.eq.s32.totalorder %s17, 3
      %p94 = por %p92, %p93
      %p96 = scmp.ne.s32.totalorder %s79, %s95
      %p97 = scmp.eq.s32.totalorder %s17, 0
      %p98 = por %p96, %p97
      %s99 = ssub.s32 %s18, %s30
      %p100 = scmp.eq.s32.totalorder %s99, 0
      %s102 = sadd.s32 %s101, 1
      %s103 = scalar_select %p100, %s101, %s102
      %p106 = pneg %p100
      %p107 = scmp.eq.s32.totalorder %s11, 3
      %p108 = por %p106, %p107
      %p109 = scmp.ne.s32.totalorder %s101, %s104
      %p110 = scmp.eq.s32.totalorder %s11, 0
      %p111 = por %p109, %p110
      %p112 = scmp.ne.s32.totalorder %s101, %s104
      %p113 = scmp.eq.s32.totalorder %s16, 3
      %p114 = por %p112, %p113
      %p115 = scmp.ne.s32.totalorder %s104, %s105
      %p116 = scmp.eq.s32.totalorder %s16, 0
      %p117 = por %p115, %p116
      %p118 = scmp.ne.s32.totalorder %s104, %s105
      %p119 = scmp.eq.s32.totalorder %s17, 3
      %p120 = por %p118, %p119
      %p122 = scmp.ne.s32.totalorder %s105, %s121
      %p123 = scmp.eq.s32.totalorder %s17, 0
      %p124 = por %p122, %p123
      %p125 = scmp.le.s32.totalorder 1, %s11
      %p126 = scmp.lt.s32.totalorder %s11, 5
      %p127 = pnand %p125, %p126
      %p128 = pneg %p127
      // Predicated region
      $region9: #{tpu_custom_call.1} parent=5 // pred_check
        _
      $region10: #{tpu_custom_call.1} parent=5 // pred_check_branch
        %130 = sbr.rel (%p127) target = $region12
      $region11: #{tpu_custom_call.1} parent=5 // pred_region
        %s131 = ssub.s32 %s11, 1
      $region12: #{tpu_custom_call.1} parent=5 // pred_fallthru
        _
      %p132 = scmp.lt.s32.totalorder %s11, 4
      // Predicated region
      $region13: #{tpu_custom_call.1} parent=5 // pred_check
        %p133 = pneg %p132
      $region14: #{tpu_custom_call.1} parent=5 // pred_check_branch
        %135 = sbr.rel (%p133) target = $region16
      $region15: #{tpu_custom_call.1} parent=5 // pred_region
        // Predicated region
        $region17: #{tpu_custom_call.1} parent=15 // pred_check
          %p136 = pneg %p51
        $region18: #{tpu_custom_call.1} parent=15 // pred_check_branch
          %138 = sbr.rel (%p136) target = $region20
        $region19: #{tpu_custom_call.1} parent=15 // pred_region
          %s139 = smul.u32 %s18, 2
          %s140 = sadd.s32 %s139, %s19
          %p141 = scmp.lt.s32.totalorder %s140, 2
          %s142 = scalar_select %p141, %s140, 2
          %p143 = scmp.lt.s32.totalorder %s142, 2
          %s144 = scalar_select %p143, %s142, 2
          %s145 = smul.addr %s144, 8
          %s146 = scalar_lea.vmem %s0, %s145
          %s147 = smul.u32 %s18, 2
          %s148 = sadd.s32 %s147, %s19
          %p149 = scmp.lt.s32.totalorder %s148, 2
          %s150 = scalar_select %p149, %s148, 2
        $region20: #{tpu_custom_call.1} parent=15 // pred_fallthru
          _
        // Predicated region
        $region21: #{tpu_custom_call.1} parent=15 // pred_check
          %p151 = pneg %p85
        $region22: #{tpu_custom_call.1} parent=15 // pred_check_branch
          %153 = sbr.rel (%p151) target = $region24
        $region23: #{tpu_custom_call.1} parent=15 // pred_region
          %s154 = smul.u32 %s18, 2
          %s155 = sadd.s32 %s154, %s19
          %p156 = scmp.lt.s32.totalorder %s155, 2
          %s157 = scalar_select %p156, %s155, 2
          %p158 = scmp.lt.s32.totalorder %s157, 2
          %s159 = scalar_select %p158, %s157, 2
          %s160 = smul.addr %s159, 8
          %s161 = scalar_lea.vmem %s1, %s160
          %s162 = smul.u32 %s18, 2
          %s163 = sadd.s32 %s162, %s19
          %p164 = scmp.lt.s32.totalorder %s163, 2
          %s165 = scalar_select %p164, %s163, 2
        $region24: #{tpu_custom_call.1} parent=15 // pred_fallthru
          _
      $region16: #{tpu_custom_call.1} parent=5 // pred_fallthru
        _
      %p166 = scmp.le.s32.totalorder 1, %s11
      %p167 = scmp.lt.s32.totalorder %s11, 5
      %p168 = pnand %p166, %p167
      %p169 = pneg %p168
      // Predicated region
      $region25: #{tpu_custom_call.1} parent=5 // pred_check
        _
      $region26: #{tpu_custom_call.1} parent=5 // pred_check_branch
        %171 = sbr.rel (%p168) target = $region28
      $region27: #{tpu_custom_call.1} parent=5 // pred_region
        %s172 = ssub.s32 %s11, 1
        %s173 = smul.u32 %s20, 2
        %s174 = sadd.s32 %s173, %s21
        %p175 = scmp.lt.s32.totalorder %s174, 2
        %s176 = scalar_select %p175, %s174, 2
        %p177 = scmp.lt.s32.totalorder %s176, 2
        %s178 = scalar_select %p177, %s176, 2
        %s179 = smul.addr %s178, 8
        %s180 = scalar_lea.vmem %s0, %s179
        %p181 = pneg %p57
        %p182 = pneg %p54
        %s183 = smul.u32 %s20, 2
        %s184 = sadd.s32 %s183, %s21
        %p185 = scmp.lt.s32.totalorder %s184, 2
        %s186 = scalar_select %p185, %s184, 2
        %p187 = scmp.lt.s32.totalorder %s186, 2
        %s188 = scalar_select %p187, %s186, 2
        %s189 = smul.addr %s188, 8
        %s190 = scalar_lea.vmem %s1, %s189
        %p191 = pneg %p91
        %p192 = pneg %p88
        %p193 = pneg %p117
        %p194 = pneg %p114
        %s195 = sand.u32 %s104, 1
        %s196 = scalar_lea.sflag [#allocation5], %s195
        %s197 = sand.u32 %s104, 1
        %s198 = smul.addr %s197, 8
        %s199 = scalar_lea.vmem [#allocation4], %s198
        %s200 = smul.u32 %s20, 2
        %s201 = sadd.s32 %s200, %s21
        %p202 = scmp.lt.s32.totalorder %s201, 2
        %s203 = scalar_select %p202, %s201, 2
        %p204 = scmp.lt.s32.totalorder %s203, 2
        %s205 = scalar_select %p204, %s203, 2
        %s206 = smul.addr %s205, 8
        %s207 = scalar_lea.vmem %s0, %s206
        %s208 = smul.u32 %s20, 2
        %s209 = sadd.s32 %s208, %s21
        %p210 = scmp.lt.s32.totalorder %s209, 2
        %s211 = scalar_select %p210, %s209, 2
        %s212 = smul.u32 %s20, 2
        %s213 = sadd.s32 %s212, %s21
        %p214 = scmp.lt.s32.totalorder %s213, 2
        %s215 = scalar_select %p214, %s213, 2
        %p216 = scmp.lt.s32.totalorder %s215, 2
        %s217 = scalar_select %p216, %s215, 2
        %s218 = smul.addr %s217, 8
        %s219 = scalar_lea.vmem %s1, %s218
        %s220 = smul.u32 %s20, 2
        %s221 = sadd.s32 %s220, %s21
        %p222 = scmp.lt.s32.totalorder %s221, 2
        %s223 = scalar_select %p222, %s221, 2
        %p224 = scmp.eq.s32.totalorder %s21, 0
        // Predicated region
        $region29: #{tpu_custom_call.1} parent=27 // pred_check
          %p225 = pneg %p224
        $region30: #{tpu_custom_call.1} parent=27 // pred_check_branch
          %227 = sbr.rel (%p225) target = $region32
        $region31: #{tpu_custom_call.1} parent=27 // pred_region
          %vm228 = vcmask 408576
          %229 = vst.msk [vmem:[#allocation2] sm:$0xff] %vm228, 0.0
          %vm230 = vcmask 0
          %231 = vst.msk [vmem:[#allocation3] sm:$0x1] %vm230, 0.0
        $region32: #{tpu_custom_call.1} parent=27 // pred_fallthru
          _
        %v232 = vld [vmem:[%s207] sm:$0xff]
        %v233 = vld [vmem:[%s219] sm:$0xff]
        %s234 = smul.u32 %s20, 2
        %s235 = sadd.s32 %s234, %s21
        %s236 = smul.u32 %s235, 8
        %v237 = vlaneseq
        %v238 = vshrl.u32 %v237, 7
        %v239 = vstv %s236
        %v240 = vadd.s32 %v239, %v238
        %vm241 = vcmp.ne.s32.totalorder %v233, 0
        %vm242 = vcmp.lt.s32.totalorder %v240, 18
        %vm243 = vmand %vm241, %vm242
        %v244 = vsel %vm243, 1, 0
        %245 = vset.pattern.permute.xlu0 0
        %246 = vperm.xlu0 %245, %v244
        %v247 = vpop.permute.xlu0 %246
        %vm248 = vcmp.eq.s32.totalorder %v247, 1
        %v249 = vsel %vm248, %v232, 0.0
        %v250 = vlaneseq
        %v251 = vand.u32 %v250, 127
        %252 = vset.pattern.permute.xlu0 0
        %253 = vperm.xlu0 %252, %v233
        %v254 = vpop.permute.xlu0 %253
        %vm255 = vcmp.eq.s32.totalorder %v251, %v254
        %vm256 = vcmp.eq.s32.totalorder %v251, 0
        %v257 = vsel %vm256, 0.0, -0.0020833334
        %v258 = vsel %vm255, -0.9, %v257
        %v259 = vmul.f32 %v258, %v249
        %v260 = vld [vmem:[#allocation2] sm:$0xff]
        %v261 = vadd.f32 %v260, %v259
        %vm262 = vcmask 408576
        %263 = vst.msk [vmem:[#allocation2] sm:$0xff] %vm262, %v261
        %v264 = vld [vmem:[#allocation3] sm:$0x1]
        %v265 = vcvt.s32.f32 %v244
        %vm266 = vcmask 7168
        %v267 = vsel %vm266, %v265, 0.0
        %268 = vadd.xlane.f32.xlu0 %v267
        %v269 = vpop.xlane.xlu0 %268
        %v270 = vrot.slane %v269, 4
        %v271 = vadd.f32 %v269, %v270
        %v272 = vrot.slane %v271, 2
        %v273 = vadd.f32 %v271, %v272
        %v274 = vrot.slane %v273, 1
        %v275 = vadd.f32 %v273, %v274
        %s276 = vtos %v275
        %v277 = vstv %s276
        %v278 = vadd.f32 %v264, %v277
        %vm279 = vcmask 0
        %280 = vst.msk [vmem:[#allocation3] sm:$0x1] %vm279, %v278
        %p281 = scmp.eq.s32.totalorder %s21, 1
        // Predicated region
        $region33: #{tpu_custom_call.1} parent=27 // pred_check
          %p282 = pneg %p281
        $region34: #{tpu_custom_call.1} parent=27 // pred_check_branch
          %284 = sbr.rel (%p282) target = $region36
        $region35: #{tpu_custom_call.1} parent=27 // pred_region
          %v285 = vld [vmem:[#allocation2] sm:$0xff]
          %v286 = vsel %vm262, %v285, 0.0
          %287 = vadd.xlane.f32.xlu0 %v286
          %v288 = vpop.xlane.xlu0 %287
          %v289 = vrot.slane %v288, 4
          %v290 = vadd.f32 %v288, %v289
          %v291 = vrot.slane %v290, 2
          %v292 = vadd.f32 %v290, %v291
          %v293 = vrot.slane %v292, 1
          %v294 = vadd.f32 %v292, %v293
          %s295 = vtos %v294
          %v296 = vld [vmem:[#allocation3] sm:$0x1]
          %v297 = vmul.f32 %v296, -0.7122031
          %v298 = vstv %s295
          %v299 = vadd.f32 %v298, %v297
          %v301 = vlaneseq
          %v302 = vshrl.u32 %v301, 7
          %v303 = vsub.s32 0, %v302
          %v304 = vrot.slane %v299, %v303
          %305 = vset.pattern.permute.xlu0 0
          %306 = vperm.xlu0 %305, %v304
          %v307 = vpop.permute.xlu0 %306
          %309 = vst [vmem:[%s199] sm:$0xff] %v307
        $region36: #{tpu_custom_call.1} parent=27 // pred_fallthru
          _
        %s310 = sand.u32 %s104, 1
        %s311 = scalar_lea.sflag [#allocation5], %s310
        %s312 = sand.u32 %s104, 1
        %s313 = smul.addr %s312, 8
        %s314 = scalar_lea.vmem [#allocation4], %s313
        // Predicated region
        $region37: #{tpu_custom_call.1} parent=27 // pred_check
          %p315 = pneg %p114
        $region38: #{tpu_custom_call.1} parent=27 // pred_check_branch
          %317 = sbr.rel (%p315) target = $region40
        $region39: #{tpu_custom_call.1} parent=27 // pred_region
          %s319 = ssub.s32 128, 128
          %320 = vsyncadd %s311, %s319
          %s321 = smul.addr %s20, 128
          %s322 = scalar_lea.hbm %s2, %s321
          %s324 = sshll.u32 %s314, 4
          %s325 = int_to_ptr.vmem [resolvable:$true] %s324
          %327 = dma.vmem_to_hbm [thread:$0]  %s325, 128, %s322, %s311
        $region40: #{tpu_custom_call.1} parent=27 // pred_fallthru
          _
      $region28: #{tpu_custom_call.1} parent=5 // pred_fallthru
        _
      %p328 = scmp.le.s32.totalorder 2, %s11
      // Predicated region
      $region41: #{tpu_custom_call.1} parent=5 // pred_check
        %p329 = pneg %p328
      $region42: #{tpu_custom_call.1} parent=5 // pred_check_branch
        %331 = sbr.rel (%p329) target = $region44
      $region43: #{tpu_custom_call.1} parent=5 // pred_region
        %s332 = ssub.s32 %s11, 2
        // Predicated region
        $region45: #{tpu_custom_call.1} parent=43 // pred_check
          %p333 = pneg %p120
        $region46: #{tpu_custom_call.1} parent=43 // pred_check_branch
          %335 = sbr.rel (%p333) target = $region48
        $region47: #{tpu_custom_call.1} parent=43 // pred_region
          %s336 = sand.u32 %s105, 1
          %s337 = scalar_lea.sflag [#allocation5], %s336
          %s338 = sand.u32 %s105, 1
          %s339 = smul.addr %s338, 8
          %s340 = scalar_lea.vmem [#allocation4], %s339
          %341 = dma.done %s337, 128
        $region48: #{tpu_custom_call.1} parent=43 // pred_fallthru
          _
      $region44: #{tpu_custom_call.1} parent=5 // pred_fallthru
        _
    $region6: #{tpu_custom_call.1} parent=1 // loop_footer
      %s15 = sadd.s32 1, %s11
    $region7: #{tpu_custom_call.1} parent=1 // loop_footer_branch
      %10 = sbr.rel target = $region3
    $region8: #{tpu_custom_call.1} parent=1 // loop_exit
      _
    %342 = vsyncpa [#allocation5], 1
    %s343 = scalar_lea.sflag [#allocation5], 1
    %344 = vsyncpa %s343, 1

</llo_original>
